<compile_context>
chip_gen: v5e
topology: v5e:2x2
jax: 0.10.0
libtpu: 0.0.40
codegen_flags: <defaults>
</compile_context>

<pallas_src>
import functools

import jax
import jax.numpy as jnp
from jax import lax
from jax.experimental import pallas as pl
from jax.experimental.pallas import tpu as pltpu


def _round_up(x: int, m: int) -> int:
    return ((x + m - 1) // m) * m


def _linear_tiled_kernel(x_ref, w_ref, b_ref, o_ref, acc_ref, *, precision):
    """One (tm, tn) output tile, accumulated over the K grid axis."""
    k = pl.program_id(2)

    @pl.when(k == 0)
    def _():
        acc_ref[...] = jnp.zeros_like(acc_ref)

    # x tile (tm, tk) @ w tile (tk, tn) -- weight already transposed in the
    # wrapper, so the MXU gets its natural layout and the output is lane-dense.
    acc_ref[...] += jnp.dot(
        x_ref[...],
        w_ref[...],
        preferred_element_type=jnp.float32,
        precision=precision,
    )

    @pl.when(k == pl.num_programs(2) - 1)
    def _():
        # Single fp32 bias add per output tile on the accumulator, then exactly
        # one cast to the output dtype.
        o_ref[...] = (acc_ref[...] + b_ref[...]).astype(o_ref.dtype)


@functools.partial(jax.jit, static_argnames=("use_amp", "tm", "tn", "tk"))
def autocast_linear(x, weight, bias, *, use_amp: bool, tm: int = 256, tn: int = 256, tk: int = 512):
    """Forward of AutocastModel(nn.Linear(F_in, F_out), use_amp).

    x: [B, F_in] fp32, weight: [F_out, F_in] fp32 (PyTorch convention), bias: [F_out].
    Default tiles target v6e/v7x (256/256/512); pass tm=tn=128, tk=256 on v5e.
    Tiles are clamped to the (padded) problem size for small shapes.
    """
    B, F_in = x.shape
    F_out, _ = weight.shape

    if use_amp:
        # torch autocast addmm semantics on TPU: bf16 operands, fp32 MXU
        # accumulation, half-precision result.  Cast once here so the kernel
        # streams 2 B/elem from HBM instead of 4 B/elem.
        x = x.astype(jnp.bfloat16)
        weight = weight.astype(jnp.bfloat16)
        out_dtype = jnp.bfloat16
        precision = None  # default MXU bf16 path
        m_align = 16      # bf16 sublane packing
    else:
        out_dtype = jnp.float32
        precision = lax.Precision.HIGHEST  # autocast disabled -> true fp32 math
        m_align = 8

    # Bias is added in fp32 inside the kernel in both modes (negligible bytes,
    # one fewer rounding step than torch's bf16 bias cast).
    bias = bias.astype(jnp.float32)

    # Pre-transpose weight to [F_in, F_out] so kernel tiles are (tk, tn).
    w_t = weight.T

    # Clamp tiles to the problem size, keeping (sublane, lane) alignment.
    tm_eff = min(tm, _round_up(B, m_align))
    tk_eff = min(tk, _round_up(F_in, 128))
    tn_eff = min(tn, _round_up(F_out, 128))

    Mp = _round_up(B, tm_eff)
    Kp = _round_up(F_in, tk_eff)
    Np = _round_up(F_out, tn_eff)

    x_p = jnp.pad(x, ((0, Mp - B), (0, Kp - F_in)))
    w_p = jnp.pad(w_t, ((0, Kp - F_in), (0, Np - F_out)))
    b_p = jnp.pad(bias, (0, Np - F_out)).reshape(1, Np)

    grid = (Mp // tm_eff, Np // tn_eff, Kp // tk_eff)

    elt = 2 if use_amp else 4
    cost = pl.CostEstimate(
        flops=2 * Mp * Np * Kp,
        transcendentals=0,
        bytes_accessed=(Mp * Kp + Kp * Np) * elt + Np * 4 + Mp * Np * elt,
    )

    kernel = functools.partial(_linear_tiled_kernel, precision=precision)

    out_p = pl.pallas_call(
        kernel,
        out_shape=jax.ShapeDtypeStruct((Mp, Np), out_dtype),
        grid_spec=pltpu.PrefetchScalarGridSpec(
            num_scalar_prefetch=0,
            grid=grid,
            in_specs=[
                pl.BlockSpec((tm_eff, tk_eff), lambda i, j, k: (i, k)),   # x
                pl.BlockSpec((tk_eff, tn_eff), lambda i, j, k: (k, j)),   # W.T
                pl.BlockSpec((1, tn_eff), lambda i, j, k: (0, j)),        # bias (fp32)
            ],
            out_specs=pl.BlockSpec((tm_eff, tn_eff), lambda i, j, k: (i, j)),
            scratch_shapes=[pltpu.VMEM((tm_eff, tn_eff), jnp.float32)],
        ),
        compiler_params=pltpu.CompilerParams(
            dimension_semantics=("parallel", "parallel", "arbitrary"),
            vmem_limit_bytes=64 << 20,
        ),
        cost_estimate=cost,
    )(x_p, w_p, b_p)

    # Slice off M/N padding.
    return out_p[:B, :F_out]


if __name__ == "__main__":
    # Deterministic synthetic parameters for nn.Linear(384, 256); shapes are kept
    # small but still exercise a multi-step (M, N, K) grid with 128-tiles below.
    key = jax.random.PRNGKey(0)
    kx, kw, kb = jax.random.split(key, 3)

    B, F_in, F_out = 48, 384, 256
    x = jax.random.normal(kx, (B, F_in), dtype=jnp.float32)
    weight = jax.random.normal(kw, (F_out, F_in), dtype=jnp.float32) * 0.05
    bias = jax.random.normal(kb, (F_out,), dtype=jnp.float32) * 0.1

    # use_amp=True: autocast enabled -> bf16 operands, fp32 accumulation, bf16 out.
    # Explicit small tiles -> grid (1, 2, 3): exercises accumulator init/finalize.
    y_amp = autocast_linear(x, weight, bias, use_amp=True, tm=128, tn=128, tk=128)
    y_amp = jax.block_until_ready(y_amp)
    assert y_amp.shape == (B, F_out) and y_amp.dtype == jnp.bfloat16

    # Same AMP call with the default (v6e/v7x-sized) tiles, clamped to the problem.
    y_amp_def = autocast_linear(x, weight, bias, use_amp=True)
    y_amp_def = jax.block_until_ready(y_amp_def)
    assert jnp.allclose(y_amp_def.astype(jnp.float32), y_amp.astype(jnp.float32), atol=2e-2)

    # use_amp=False: autocast disabled -> full fp32 math, fp32 out.
    y_fp32 = autocast_linear(x, weight, bias, use_amp=False, tm=128, tn=128, tk=128)
    y_fp32 = jax.block_until_ready(y_fp32)
    assert y_fp32.shape == (B, F_out) and y_fp32.dtype == jnp.float32

    # Reference checks against plain JAX.
    ref = x @ weight.T + bias
    assert jnp.allclose(y_fp32, ref, atol=1e-3, rtol=1e-3)
    assert jnp.allclose(y_amp.astype(jnp.float32), ref, atol=1e-1)

    print("KERNEL_OK")
</pallas_src>

<mosaic_0001>
module attributes {stable_mosaic.version = 11 : i64} {
  func.func @_linear_tiled_kernel(%arg0: i32, %arg1: i32, %arg2: i32, %arg3: memref<48x128xbf16, #tpu.memory_space<vmem>>, %arg4: memref<128x128xbf16, #tpu.memory_space<vmem>>, %arg5: memref<1x128xf32, #tpu.memory_space<vmem>>, %arg6: memref<48x128xbf16, #tpu.memory_space<vmem>>, %arg7: memref<48x128xf32, #tpu.memory_space<vmem>>) attributes {dimension_semantics = [#tpu.dimension_semantics<parallel>, #tpu.dimension_semantics<parallel>, #tpu.dimension_semantics<arbitrary>], iteration_bounds = array<i64: 1, 2, 3>, scalar_prefetch = 0 : i64, scratch_operands = 1 : i64, tpu.core_type = #tpu.core_type<tc>, window_params = [{transform_indices = @transform_0, window_bounds = array<i64: 48, 128>}, {transform_indices = @transform_1, window_bounds = array<i64: 128, 128>}, {transform_indices = @transform_2, window_bounds = array<i64: 1, 128>}, {transform_indices = @transform_3, window_bounds = array<i64: 48, 128>}]} {
    %c0_i32 = arith.constant 0 : i32
    %0 = arith.cmpi eq, %arg2, %c0_i32 : i32
    %1 = arith.extui %0 : i1 to i32
    %c0_i32_0 = arith.constant 0 : i32
    %2 = arith.cmpi ne, %1, %c0_i32_0 : i32
    scf.if %2 {
      %cst_9 = arith.constant 0.000000e+00 : f32
      %12 = vector.broadcast %cst_9 : f32 to vector<48x128xf32>
      %c0_10 = arith.constant 0 : index
      %c0_11 = arith.constant 0 : index
      %13 = vector.load %arg7[%c0_10, %c0_11] : memref<48x128xf32, #tpu.memory_space<vmem>>, vector<48x128xf32>
      tpu.vector_store %arg7[%c0_10, %c0_11], %12 {strides = array<i32>} : memref<48x128xf32, #tpu.memory_space<vmem>>, vector<48x128xf32>,
    } else {
    }
    %c0 = arith.constant 0 : index
    %c0_1 = arith.constant 0 : index
    %3 = vector.load %arg7[%c0, %c0_1] : memref<48x128xf32, #tpu.memory_space<vmem>>, vector<48x128xf32>
    %c0_2 = arith.constant 0 : index
    %c0_3 = arith.constant 0 : index
    %4 = vector.load %arg3[%c0_2, %c0_3] : memref<48x128xbf16, #tpu.memory_space<vmem>>, vector<48x128xbf16>
    %c0_4 = arith.constant 0 : index
    %c0_5 = arith.constant 0 : index
    %5 = vector.load %arg4[%c0_4, %c0_5] : memref<128x128xbf16, #tpu.memory_space<vmem>>, vector<128x128xbf16>
    %cst = arith.constant dense<0.000000e+00> : vector<48x128xf32>
    %6 = tpu.matmul %4, %5, %cst {dimension_numbers = #tpu.dot_dimension_numbers<[1], [0], [0], [1], [0, 0, 1, 1], [], []>} : vector<48x128xbf16>, vector<128x128xbf16>, vector<48x128xf32> -> vector<48x128xf32>
    %7 = arith.addf %3, %6 : vector<48x128xf32>
    %c0_6 = arith.constant 0 : index
    %c0_7 = arith.constant 0 : index
    %8 = vector.load %arg7[%c0_6, %c0_7] : memref<48x128xf32, #tpu.memory_space<vmem>>, vector<48x128xf32>
    tpu.vector_store %arg7[%c0_6, %c0_7], %7 {strides = array<i32>} : memref<48x128xf32, #tpu.memory_space<vmem>>, vector<48x128xf32>,
    %c2_i32 = arith.constant 2 : i32
    %9 = arith.cmpi eq, %arg2, %c2_i32 : i32
    %10 = arith.extui %9 : i1 to i32
    %c0_i32_8 = arith.constant 0 : i32
    %11 = arith.cmpi ne, %10, %c0_i32_8 : i32
    scf.if %11 {
      %c0_9 = arith.constant 0 : index
      %c0_10 = arith.constant 0 : index
      %12 = vector.load %arg7[%c0_9, %c0_10] : memref<48x128xf32, #tpu.memory_space<vmem>>, vector<48x128xf32>
      %c0_11 = arith.constant 0 : index
      %c0_12 = arith.constant 0 : index
      %13 = vector.load %arg5[%c0_11, %c0_12] : memref<1x128xf32, #tpu.memory_space<vmem>>, vector<1x128xf32>
      %14 = vector.broadcast %13 : vector<1x128xf32> to vector<48x128xf32>
      %15 = arith.addf %12, %14 : vector<48x128xf32>
      %16 = arith.truncf %15 : vector<48x128xf32> to vector<48x128xbf16>
      %c0_13 = arith.constant 0 : index
      %c0_14 = arith.constant 0 : index
      %17 = vector.load %arg6[%c0_13, %c0_14] : memref<48x128xbf16, #tpu.memory_space<vmem>>, vector<48x128xbf16>
      tpu.vector_store %arg6[%c0_13, %c0_14], %16 {strides = array<i32>} : memref<48x128xbf16, #tpu.memory_space<vmem>>, vector<48x128xbf16>,
    } else {
    }
    return
  }
  func.func @transform_0(%arg0: i32, %arg1: i32, %arg2: i32) -> (i32, i32) {
    %c0_i32 = arith.constant 0 : i32
    return %arg0, %arg2 : i32, i32
  }
  func.func @transform_1(%arg0: i32, %arg1: i32, %arg2: i32) -> (i32, i32) {
    %c0_i32 = arith.constant 0 : i32
    return %arg2, %arg1 : i32, i32
  }
  func.func @transform_2(%arg0: i32, %arg1: i32, %arg2: i32) -> (i32, i32) {
    %c0_i32 = arith.constant 0 : i32
    %c0_i32_0 = arith.constant 0 : i32
    return %c0_i32, %arg1 : i32, i32
  }
  func.func @transform_3(%arg0: i32, %arg1: i32, %arg2: i32) -> (i32, i32) {
    %c0_i32 = arith.constant 0 : i32
    return %arg0, %arg1 : i32, i32
  }
}

</mosaic_0001>

<llo_original>
// kernel: autocast_linear.1
$region0: #{autocast_linear.1}
  #allocation0 [shape = 'u32[]', space=smem, size = 0x4, offset = 0x4, fixed_abs, tag = 'smem constant byte address 0x4 - core index']
  #allocation1 [shape = 'u32[72,128]{1,0:T(1,128)}', space=vmem, size = 0x9000, scoped, tag = 'internal scratch']
  #allocation2 [shape = 'f32[48,128]{1,0:T(8,128)}', space=vmem, size = 0x6000, scoped, tag = 'scratch operand']
  %s0 = inlined_call_operand.vmem [shape: bf16[48,384], index: 0, kind: input, shape index: {}]
  %s1 = inlined_call_operand.vmem [shape: bf16[384,256], index: 1, kind: input, shape index: {}]
  %s2 = inlined_call_operand.vmem [shape: f32[1,256], index: 2, kind: input, shape index: {}]
  %s3 = inlined_call_operand.hbm [shape: bf16[48,256], index: 3, kind: output, shape index: {}]
  %s4 = sld [smem:[#allocation0]]
  $region135: #{autocast_linear.1} parent=0
    _
  %s6 = ssub.s32 1, %s4
  %s7 = scalar_select 0, %s6, %s4
  $region1: #{autocast_linear.1} parent=0
    #allocation3 [shape = 'u8[24576]{0}', space=vmem, size = 0x6000, scoped, tag = 'input window, operand 0']
    #allocation4 [shape = 'u8[65536]{0}', space=vmem, size = 0x10000, scoped, tag = 'input window, operand 1']
    #allocation5 [shape = 'u8[24576]{0}', space=vmem, size = 0x6000, scoped, tag = 'output window, operand 0']
    #allocation6 [shape = 's32[2]{0}', space=sflag, size = 0x8, scoped, tag = 'scoped memory for autocast_linear.1']
    %8 = vsyncpa [#allocation6], 0
    %s9 = scalar_lea.sflag [#allocation6], 1
    %10 = vsyncpa %s9, 0
    loop: start=0, step=1, limit=8
    $region2: #{autocast_linear.1} parent=1 // loop_pre_header
      _
    $region3: #{autocast_linear.1} parent=1 // loop_header
      %s12 = sphi 0, %s16
      %p13 = scmp.ge.s32.totalorder %s12, 8
      %s19 = sphi 0, %s38
      %s20 = sphi 0, %s34
      %s21 = sphi 0, %s30
      %s22 = sphi 0, %s19
      %s23 = sphi 0, %s20
      %s24 = sphi 0, %s21
      %s25 = sphi 0, %s22
      %s26 = sphi 0, %s23
      %s27 = sphi 0, %s24
      %s43 = sphi 0, %s45
      %s46 = sphi 0, %s43
      %s47 = sphi 0, %s46
      %s63 = sphi 0, %s47
      %s71 = sphi 0, %s73
      %s74 = sphi 0, %s71
      %s75 = sphi 0, %s74
      %s91 = sphi 0, %s75
      %s97 = sphi 0, %s99
      %s100 = sphi 0, %s97
      %s101 = sphi 0, %s100
      %s117 = sphi 0, %s101
      %s125 = sphi 0, %s127
      %s128 = sphi 0, %s125
      %s129 = sphi 0, %s128
      %s145 = sphi 0, %s129
    $region4: #{autocast_linear.1} parent=1 // loop_header_branch
      %15 = sbr.rel (%p13) target = $region8
    $region5: #{autocast_linear.1} parent=1 // loop_body
      %s17 = ssub.s32 %s12, 1
      %s18 = ssub.s32 %s12, 2
      %s28 = sadd.s32 1, %s21
      %p29 = scmp.ge.s32.totalorder %s28, 3
      %s30 = scalar_select %p29, 0, %s28
      %s31 = sadd.s32 1, %s20
      %s32 = scalar_select %p29, %s31, %s20
      %p33 = scmp.ge.s32.totalorder %s32, 2
      %s34 = scalar_select %p33, 0, %s32
      %s35 = sadd.s32 1, %s19
      %s36 = scalar_select %p33, %s35, %s19
      %p37 = scmp.ge.s32.totalorder %s36, 1
      %s38 = scalar_select %p37, 0, %s36
      %s39 = ssub.s32 %s19, %s38
      %s40 = ssub.s32 %s21, %s30
      %s41 = sor.u32 %s39, %s40
      %p42 = scmp.eq.s32.totalorder %s41, 0
      %s44 = sadd.s32 %s43, 1
      %s45 = scalar_select %p42, %s43, %s44
      %p48 = pneg %p42
      %p49 = scmp.eq.s32.totalorder %s12, 5
      %p50 = por %p48, %p49
      %p51 = scmp.ne.s32.totalorder %s43, %s46
      %p52 = scmp.eq.s32.totalorder %s12, 0
      %p53 = por %p51, %p52
      %p54 = scmp.ne.s32.totalorder %s43, %s46
      %p55 = scmp.eq.s32.totalorder %s17, 5
      %p56 = por %p54, %p55
      %p57 = scmp.ne.s32.totalorder %s46, %s47
      %p58 = scmp.eq.s32.totalorder %s17, 0
      %p59 = por %p57, %p58
      %p60 = scmp.ne.s32.totalorder %s46, %s47
      %p61 = scmp.eq.s32.totalorder %s18, 5
      %p62 = por %p60, %p61
      %p64 = scmp.ne.s32.totalorder %s47, %s63
      %p65 = scmp.eq.s32.totalorder %s18, 0
      %p66 = por %p64, %p65
      %s67 = ssub.s32 %s21, %s30
      %s68 = ssub.s32 %s20, %s34
      %s69 = sor.u32 %s67, %s68
      %p70 = scmp.eq.s32.totalorder %s69, 0
      %s72 = sadd.s32 %s71, 1
      %s73 = scalar_select %p70, %s71, %s72
      %p76 = pneg %p70
      %p77 = scmp.eq.s32.totalorder %s12, 5
      %p78 = por %p76, %p77
      %p79 = scmp.ne.s32.totalorder %s71, %s74
      %p80 = scmp.eq.s32.totalorder %s12, 0
      %p81 = por %p79, %p80
      %p82 = scmp.ne.s32.totalorder %s71, %s74
      %p83 = scmp.eq.s32.totalorder %s17, 5
      %p84 = por %p82, %p83
      %p85 = scmp.ne.s32.totalorder %s74, %s75
      %p86 = scmp.eq.s32.totalorder %s17, 0
      %p87 = por %p85, %p86
      %p88 = scmp.ne.s32.totalorder %s74, %s75
      %p89 = scmp.eq.s32.totalorder %s18, 5
      %p90 = por %p88, %p89
      %p92 = scmp.ne.s32.totalorder %s75, %s91
      %p93 = scmp.eq.s32.totalorder %s18, 0
      %p94 = por %p92, %p93
      %s95 = ssub.s32 %s20, %s34
      %p96 = scmp.eq.s32.totalorder %s95, 0
      %s98 = sadd.s32 %s97, 1
      %s99 = scalar_select %p96, %s97, %s98
      %p102 = pneg %p96
      %p103 = scmp.eq.s32.totalorder %s12, 5
      %p104 = por %p102, %p103
      %p105 = scmp.ne.s32.totalorder %s97, %s100
      %p106 = scmp.eq.s32.totalorder %s12, 0
      %p107 = por %p105, %p106
      %p108 = scmp.ne.s32.totalorder %s97, %s100
      %p109 = scmp.eq.s32.totalorder %s17, 5
      %p110 = por %p108, %p109
      %p111 = scmp.ne.s32.totalorder %s100, %s101
      %p112 = scmp.eq.s32.totalorder %s17, 0
      %p113 = por %p111, %p112
      %p114 = scmp.ne.s32.totalorder %s100, %s101
      %p115 = scmp.eq.s32.totalorder %s18, 5
      %p116 = por %p114, %p115
      %p118 = scmp.ne.s32.totalorder %s101, %s117
      %p119 = scmp.eq.s32.totalorder %s18, 0
      %p120 = por %p118, %p119
      %s121 = ssub.s32 %s19, %s38
      %s122 = ssub.s32 %s20, %s34
      %s123 = sor.u32 %s121, %s122
      %p124 = scmp.eq.s32.totalorder %s123, 0
      %s126 = sadd.s32 %s125, 1
      %s127 = scalar_select %p124, %s125, %s126
      %p130 = pneg %p124
      %p131 = scmp.eq.s32.totalorder %s12, 5
      %p132 = por %p130, %p131
      %p133 = scmp.ne.s32.totalorder %s125, %s128
      %p134 = scmp.eq.s32.totalorder %s12, 0
      %p135 = por %p133, %p134
      %p136 = scmp.ne.s32.totalorder %s125, %s128
      %p137 = scmp.eq.s32.totalorder %s17, 5
      %p138 = por %p136, %p137
      %p139 = scmp.ne.s32.totalorder %s128, %s129
      %p140 = scmp.eq.s32.totalorder %s17, 0
      %p141 = por %p139, %p140
      %p142 = scmp.ne.s32.totalorder %s128, %s129
      %p143 = scmp.eq.s32.totalorder %s18, 5
      %p144 = por %p142, %p143
      %p146 = scmp.ne.s32.totalorder %s129, %s145
      %p147 = scmp.eq.s32.totalorder %s18, 0
      %p148 = por %p146, %p147
      %p149 = scmp.le.s32.totalorder 1, %s12
      %p150 = scmp.lt.s32.totalorder %s12, 7
      %p151 = pnand %p149, %p150
      %p152 = pneg %p151
      // Predicated region
      $region9: #{autocast_linear.1} parent=5 // pred_check
        _
      $region10: #{autocast_linear.1} parent=5 // pred_check_branch
        %154 = sbr.rel (%p151) target = $region12
      $region11: #{autocast_linear.1} parent=5 // pred_region
        %s155 = ssub.s32 %s12, 1
      $region12: #{autocast_linear.1} parent=5 // pred_fallthru
        _
      %p156 = scmp.lt.s32.totalorder %s12, 6
      // Predicated region
      $region13: #{autocast_linear.1} parent=5 // pred_check
        %p157 = pneg %p156
      $region14: #{autocast_linear.1} parent=5 // pred_check_branch
        %159 = sbr.rel (%p157) target = $region16
      $region15: #{autocast_linear.1} parent=5 // pred_region
        // Predicated region
        $region17: #{autocast_linear.1} parent=15 // pred_check
          %p160 = pneg %p53
        $region18: #{autocast_linear.1} parent=15 // pred_check_branch
          %162 = sbr.rel (%p160) target = $region20
        $region19: #{autocast_linear.1} parent=15 // pred_region
          %s163 = sand.u32 %s43, 1
          %s164 = sand.u32 %s43, 1
          %s165 = smul.addr %s164, 24
          %s166 = scalar_lea.vmem [#allocation3], %s165
          %s167 = smul.u32 6, %s19
          %s168 = smul.addr %s167, 3
          %s169 = sadd.s32 %s21, %s168
          %s170 = smul.addr %s169, 4
          %s171 = scalar_lea.vmem %s0, %s170
          // Predicated region
          $region21: #{autocast_linear.1} parent=19 // pred_check
            _
          $region22: #{autocast_linear.1} parent=19 // pred_check_branch
            %173 = sbr.rel (0) target = $region24
          $region23: #{autocast_linear.1} parent=19 // pred_region
            // Predicated region
            $region25: #{autocast_linear.1} parent=23 // pred_check
              _
            $region26: #{autocast_linear.1} parent=23 // pred_check_branch
              %175 = sbr.rel target = $region28
            $region27: #{autocast_linear.1} parent=23 // pred_region
              // Predicated region
              $region40: #{autocast_linear.1} parent=27 // pred_check
                _
              $region41: #{autocast_linear.1} parent=27 // pred_check_branch
                %201 = sbr.rel (0) target = $region43
              $region42: #{autocast_linear.1} parent=27 // pred_region
                loop: start=0, step=1, limit=1
                $region44: #{autocast_linear.1} parent=42 // loop_pre_header
                  _
                $region45: #{autocast_linear.1} parent=42 // loop_header
                  %s203 = sphi 0, %s207
                  %p204 = scmp.ge.s32.totalorder %s203, 1
                  %s208 = sphi %s171, %s171
                  %s209 = sphi %s166, %s166
                $region46: #{autocast_linear.1} parent=42 // loop_header_branch
                  %206 = sbr.rel (%p204) target = $region50
                $region47: #{autocast_linear.1} parent=42 // loop_body
                  _
                $region48: #{autocast_linear.1} parent=42 // loop_footer
                  %s207 = sadd.s32 1, %s203
                $region49: #{autocast_linear.1} parent=42 // loop_footer_branch
                  %202 = sbr.rel target = $region45
                $region50: #{autocast_linear.1} parent=42 // loop_exit
                  _
                %s211 = ssub.s32 16, 1
                loop: start=0, step=1, limit=1
                $region51: #{autocast_linear.1} parent=42 // loop_pre_header
                  _
                $region52: #{autocast_linear.1} parent=42 // loop_header
                  %s213 = sphi 0, %s217
                  %p214 = scmp.ge.s32.totalorder %s213, 1
                  %s218 = sphi %s171, %s171
                  %s219 = sphi %s166, %s166
                $region53: #{autocast_linear.1} parent=42 // loop_header_branch
                  %216 = sbr.rel (%p214) target = $region57
                $region54: #{autocast_linear.1} parent=42 // loop_body
                  %v220 = vld [vmem:[%s218] sm:%s211]
                  %221 = vst [vmem:[%s219] sm:%s211] %v220
                  %v222 = vld [vmem:[%s218 + $0xc] sm:%s211]
                  %223 = vst [vmem:[%s219 + $0x4] sm:%s211] %v222
                  %v224 = vld [vmem:[%s218 + $0x18] sm:%s211]
                  %225 = vst [vmem:[%s219 + $0x8] sm:%s211] %v224
                  %v226 = vld [vmem:[%s218 + $0x24] sm:%s211]
                  %227 = vst [vmem:[%s219 + $0xc] sm:%s211] %v226
                  %v228 = vld [vmem:[%s218 + $0x30] sm:%s211]
                  %229 = vst [vmem:[%s219 + $0x10] sm:%s211] %v228
                  %v230 = vld [vmem:[%s218 + $0x3c] sm:%s211]
                  %231 = vst [vmem:[%s219 + $0x14] sm:%s211] %v230
                $region55: #{autocast_linear.1} parent=42 // loop_footer
                  %s217 = sadd.s32 1, %s213
                $region56: #{autocast_linear.1} parent=42 // loop_footer_branch
                  %212 = sbr.rel target = $region52
                $region57: #{autocast_linear.1} parent=42 // loop_exit
                  _
              $region43: #{autocast_linear.1} parent=27 // pred_fallthru
                _
            $region28: #{autocast_linear.1} parent=23 // pred_fallthru
              _
            // Predicated region
            $region29: #{autocast_linear.1} parent=23 // pred_check
              _
            $region30: #{autocast_linear.1} parent=23 // pred_check_branch
              %177 = sbr.rel (0) target = $region32
            $region31: #{autocast_linear.1} parent=23 // pred_region
              %s179 = ssub.s32 16, 1
              loop: start=0, step=1, limit=1
              $region33: #{autocast_linear.1} parent=31 // loop_pre_header
                _
              $region34: #{autocast_linear.1} parent=31 // loop_header
                %s181 = sphi 0, %s185
                %p182 = scmp.ge.s32.totalorder %s181, 1
                %s186 = sphi %s171, %s171
                %s187 = sphi %s166, %s166
              $region35: #{autocast_linear.1} parent=31 // loop_header_branch
                %184 = sbr.rel (%p182) target = $region39
              $region36: #{autocast_linear.1} parent=31 // loop_body
                %v188 = vld [vmem:[%s186] sm:%s179]
                %189 = vst [vmem:[%s187] sm:%s179] %v188
                %v190 = vld [vmem:[%s186 + $0xc] sm:%s179]
                %191 = vst [vmem:[%s187 + $0x4] sm:%s179] %v190
                %v192 = vld [vmem:[%s186 + $0x18] sm:%s179]
                %193 = vst [vmem:[%s187 + $0x8] sm:%s179] %v192
                %v194 = vld [vmem:[%s186 + $0x24] sm:%s179]
                %195 = vst [vmem:[%s187 + $0xc] sm:%s179] %v194
                %v196 = vld [vmem:[%s186 + $0x30] sm:%s179]
                %197 = vst [vmem:[%s187 + $0x10] sm:%s179] %v196
                %v198 = vld [vmem:[%s186 + $0x3c] sm:%s179]
                %199 = vst [vmem:[%s187 + $0x14] sm:%s179] %v198
              $region37: #{autocast_linear.1} parent=31 // loop_footer
                %s185 = sadd.s32 1, %s181
              $region38: #{autocast_linear.1} parent=31 // loop_footer_branch
                %180 = sbr.rel target = $region34
              $region39: #{autocast_linear.1} parent=31 // loop_exit
                _
            $region32: #{autocast_linear.1} parent=23 // pred_fallthru
              _
          $region24: #{autocast_linear.1} parent=19 // pred_fallthru
            _
          %232 = vnop
        $region20: #{autocast_linear.1} parent=15 // pred_fallthru
          _
        // Predicated region
        $region58: #{autocast_linear.1} parent=15 // pred_check
          %p233 = pneg %p81
        $region59: #{autocast_linear.1} parent=15 // pred_check_branch
          %235 = sbr.rel (%p233) target = $region61
        $region60: #{autocast_linear.1} parent=15 // pred_region
          %s236 = sand.u32 %s71, 1
          %s237 = sand.u32 %s71, 1
          %s238 = smul.addr %s237, 64
          %s239 = scalar_lea.vmem [#allocation4], %s238
          %s240 = smul.u32 16, %s21
          %s241 = smul.addr %s240, 2
          %s242 = sadd.s32 %s20, %s241
          %s243 = smul.addr %s242, 4
          %s244 = scalar_lea.vmem %s1, %s243
          // Predicated region
          $region62: #{autocast_linear.1} parent=60 // pred_check
            _
          $region63: #{autocast_linear.1} parent=60 // pred_check_branch
            %246 = sbr.rel (0) target = $region65
          $region64: #{autocast_linear.1} parent=60 // pred_region
            // Predicated region
            $region66: #{autocast_linear.1} parent=64 // pred_check
              _
            $region67: #{autocast_linear.1} parent=64 // pred_check_branch
              %248 = sbr.rel target = $region69
            $region68: #{autocast_linear.1} parent=64 // pred_region
              // Predicated region
              $region81: #{autocast_linear.1} parent=68 // pred_check
                _
              $region82: #{autocast_linear.1} parent=68 // pred_check_branch
                %294 = sbr.rel (0) target = $region84
              $region83: #{autocast_linear.1} parent=68 // pred_region
                loop: start=0, step=1, limit=1
                $region85: #{autocast_linear.1} parent=83 // loop_pre_header
                  _
                $region86: #{autocast_linear.1} parent=83 // loop_header
                  %s296 = sphi 0, %s300
                  %p297 = scmp.ge.s32.totalorder %s296, 1
                  %s301 = sphi %s244, %s244
                  %s302 = sphi %s239, %s239
                $region87: #{autocast_linear.1} parent=83 // loop_header_branch
                  %299 = sbr.rel (%p297) target = $region91
                $region88: #{autocast_linear.1} parent=83 // loop_body
                  _
                $region89: #{autocast_linear.1} parent=83 // loop_footer
                  %s300 = sadd.s32 1, %s296
                $region90: #{autocast_linear.1} parent=83 // loop_footer_branch
                  %295 = sbr.rel target = $region86
                $region91: #{autocast_linear.1} parent=83 // loop_exit
                  _
                %s304 = ssub.s32 16, 1
                loop: start=0, step=1, limit=1
                $region92: #{autocast_linear.1} parent=83 // loop_pre_header
                  _
                $region93: #{autocast_linear.1} parent=83 // loop_header
                  %s306 = sphi 0, %s310
                  %p307 = scmp.ge.s32.totalorder %s306, 1
                  %s311 = sphi %s244, %s244
                  %s312 = sphi %s239, %s239
                $region94: #{autocast_linear.1} parent=83 // loop_header_branch
                  %309 = sbr.rel (%p307) target = $region98
                $region95: #{autocast_linear.1} parent=83 // loop_body
                  %v313 = vld [vmem:[%s311] sm:%s304]
                  %314 = vst [vmem:[%s312] sm:%s304] %v313
                  %v315 = vld [vmem:[%s311 + $0x8] sm:%s304]
                  %316 = vst [vmem:[%s312 + $0x4] sm:%s304] %v315
                  %v317 = vld [vmem:[%s311 + $0x10] sm:%s304]
                  %318 = vst [vmem:[%s312 + $0x8] sm:%s304] %v317
                  %v319 = vld [vmem:[%s311 + $0x18] sm:%s304]
                  %320 = vst [vmem:[%s312 + $0xc] sm:%s304] %v319
                  %v321 = vld [vmem:[%s311 + $0x20] sm:%s304]
                  %322 = vst [vmem:[%s312 + $0x10] sm:%s304] %v321
                  %v323 = vld [vmem:[%s311 + $0x28] sm:%s304]
                  %324 = vst [vmem:[%s312 + $0x14] sm:%s304] %v323
                  %v325 = vld [vmem:[%s311 + $0x30] sm:%s304]
                  %326 = vst [vmem:[%s312 + $0x18] sm:%s304] %v325
                  %v327 = vld [vmem:[%s311 + $0x38] sm:%s304]
                  %328 = vst [vmem:[%s312 + $0x1c] sm:%s304] %v327
                  %v329 = vld [vmem:[%s311 + $0x40] sm:%s304]
                  %330 = vst [vmem:[%s312 + $0x20] sm:%s304] %v329
                  %v331 = vld [vmem:[%s311 + $0x48] sm:%s304]
                  %332 = vst [vmem:[%s312 + $0x24] sm:%s304] %v331
                  %v333 = vld [vmem:[%s311 + $0x50] sm:%s304]
                  %334 = vst [vmem:[%s312 + $0x28] sm:%s304] %v333
                  %v335 = vld [vmem:[%s311 + $0x58] sm:%s304]
                  %336 = vst [vmem:[%s312 + $0x2c] sm:%s304] %v335
                  %v337 = vld [vmem:[%s311 + $0x60] sm:%s304]
                  %338 = vst [vmem:[%s312 + $0x30] sm:%s304] %v337
                  %v339 = vld [vmem:[%s311 + $0x68] sm:%s304]
                  %340 = vst [vmem:[%s312 + $0x34] sm:%s304] %v339
                  %v341 = vld [vmem:[%s311 + $0x70] sm:%s304]
                  %342 = vst [vmem:[%s312 + $0x38] sm:%s304] %v341
                  %v343 = vld [vmem:[%s311 + $0x78] sm:%s304]
                  %344 = vst [vmem:[%s312 + $0x3c] sm:%s304] %v343
                $region96: #{autocast_linear.1} parent=83 // loop_footer
                  %s310 = sadd.s32 1, %s306
                $region97: #{autocast_linear.1} parent=83 // loop_footer_branch
                  %305 = sbr.rel target = $region93
                $region98: #{autocast_linear.1} parent=83 // loop_exit
                  _
              $region84: #{autocast_linear.1} parent=68 // pred_fallthru
                _
            $region69: #{autocast_linear.1} parent=64 // pred_fallthru
              _
            // Predicated region
            $region70: #{autocast_linear.1} parent=64 // pred_check
              _
            $region71: #{autocast_linear.1} parent=64 // pred_check_branch
              %250 = sbr.rel (0) target = $region73
            $region72: #{autocast_linear.1} parent=64 // pred_region
              %s252 = ssub.s32 16, 1
              loop: start=0, step=1, limit=1
              $region74: #{autocast_linear.1} parent=72 // loop_pre_header
                _
              $region75: #{autocast_linear.1} parent=72 // loop_header
                %s254 = sphi 0, %s258
                %p255 = scmp.ge.s32.totalorder %s254, 1
                %s259 = sphi %s244, %s244
                %s260 = sphi %s239, %s239
              $region76: #{autocast_linear.1} parent=72 // loop_header_branch
                %257 = sbr.rel (%p255) target = $region80
              $region77: #{autocast_linear.1} parent=72 // loop_body
                %v261 = vld [vmem:[%s259] sm:%s252]
                %262 = vst [vmem:[%s260] sm:%s252] %v261
                %v263 = vld [vmem:[%s259 + $0x8] sm:%s252]
                %264 = vst [vmem:[%s260 + $0x4] sm:%s252] %v263
                %v265 = vld [vmem:[%s259 + $0x10] sm:%s252]
                %266 = vst [vmem:[%s260 + $0x8] sm:%s252] %v265
                %v267 = vld [vmem:[%s259 + $0x18] sm:%s252]
                %268 = vst [vmem:[%s260 + $0xc] sm:%s252] %v267
                %v269 = vld [vmem:[%s259 + $0x20] sm:%s252]
                %270 = vst [vmem:[%s260 + $0x10] sm:%s252] %v269
                %v271 = vld [vmem:[%s259 + $0x28] sm:%s252]
                %272 = vst [vmem:[%s260 + $0x14] sm:%s252] %v271
                %v273 = vld [vmem:[%s259 + $0x30] sm:%s252]
                %274 = vst [vmem:[%s260 + $0x18] sm:%s252] %v273
                %v275 = vld [vmem:[%s259 + $0x38] sm:%s252]
                %276 = vst [vmem:[%s260 + $0x1c] sm:%s252] %v275
                %v277 = vld [vmem:[%s259 + $0x40] sm:%s252]
                %278 = vst [vmem:[%s260 + $0x20] sm:%s252] %v277
                %v279 = vld [vmem:[%s259 + $0x48] sm:%s252]
                %280 = vst [vmem:[%s260 + $0x24] sm:%s252] %v279
                %v281 = vld [vmem:[%s259 + $0x50] sm:%s252]
                %282 = vst [vmem:[%s260 + $0x28] sm:%s252] %v281
                %v283 = vld [vmem:[%s259 + $0x58] sm:%s252]
                %284 = vst [vmem:[%s260 + $0x2c] sm:%s252] %v283
                %v285 = vld [vmem:[%s259 + $0x60] sm:%s252]
                %286 = vst [vmem:[%s260 + $0x30] sm:%s252] %v285
                %v287 = vld [vmem:[%s259 + $0x68] sm:%s252]
                %288 = vst [vmem:[%s260 + $0x34] sm:%s252] %v287
                %v289 = vld [vmem:[%s259 + $0x70] sm:%s252]
                %290 = vst [vmem:[%s260 + $0x38] sm:%s252] %v289
                %v291 = vld [vmem:[%s259 + $0x78] sm:%s252]
                %292 = vst [vmem:[%s260 + $0x3c] sm:%s252] %v291
              $region78: #{autocast_linear.1} parent=72 // loop_footer
                %s258 = sadd.s32 1, %s254
              $region79: #{autocast_linear.1} parent=72 // loop_footer_branch
                %253 = sbr.rel target = $region75
              $region80: #{autocast_linear.1} parent=72 // loop_exit
                _
            $region73: #{autocast_linear.1} parent=64 // pred_fallthru
              _
          $region65: #{autocast_linear.1} parent=60 // pred_fallthru
            _
          %345 = vnop
        $region61: #{autocast_linear.1} parent=15 // pred_fallthru
          _
        // Predicated region
        $region99: #{autocast_linear.1} parent=15 // pred_check
          %p346 = pneg %p107
        $region100: #{autocast_linear.1} parent=15 // pred_check_branch
          %348 = sbr.rel (%p346) target = $region102
        $region101: #{autocast_linear.1} parent=15 // pred_region
          %p349 = scmp.lt.s32.totalorder %s20, 1
          %s350 = scalar_select %p349, %s20, 1
          %s351 = scalar_lea.vmem %s2, %s350
        $region102: #{autocast_linear.1} parent=15 // pred_fallthru
          _
      $region16: #{autocast_linear.1} parent=5 // pred_fallthru
        _
      %p352 = scmp.le.s32.totalorder 1, %s12
      %p353 = scmp.lt.s32.totalorder %s12, 7
      %p354 = pnand %p352, %p353
      %p355 = pneg %p354
      // Predicated region
      $region103: #{autocast_linear.1} parent=5 // pred_check
        _
      $region104: #{autocast_linear.1} parent=5 // pred_check_branch
        %357 = sbr.rel (%p354) target = $region106
      $region105: #{autocast_linear.1} parent=5 // pred_region
        %s358 = ssub.s32 %s12, 1
        %s359 = sand.u32 %s46, 1
        %s360 = sand.u32 %s46, 1
        %s361 = smul.addr %s360, 24
        %s362 = scalar_lea.vmem [#allocation3], %s361
        // Predicated region
        $region107: #{autocast_linear.1} parent=105 // pred_check
          %p363 = pneg %p59
        $region108: #{autocast_linear.1} parent=105 // pred_check_branch
          %365 = sbr.rel (%p363) target = $region110
        $region109: #{autocast_linear.1} parent=105 // pred_region
          _
        $region110: #{autocast_linear.1} parent=105 // pred_fallthru
          _
        %s366 = sand.u32 %s74, 1
        %s367 = sand.u32 %s74, 1
        %s368 = smul.addr %s367, 64
        %s369 = scalar_lea.vmem [#allocation4], %s368
        // Predicated region
        $region111: #{autocast_linear.1} parent=105 // pred_check
          %p370 = pneg %p87
        $region112: #{autocast_linear.1} parent=105 // pred_check_branch
          %372 = sbr.rel (%p370) target = $region114
        $region113: #{autocast_linear.1} parent=105 // pred_region
          _
        $region114: #{autocast_linear.1} parent=105 // pred_fallthru
          _
        %s373 = sand.u32 %s46, 1
        %s374 = sand.u32 %s46, 1
        %s375 = smul.addr %s374, 24
        %s376 = scalar_lea.vmem [#allocation3], %s375
        %p377 = pneg %p59
        %p378 = pneg %p56
        %s379 = sand.u32 %s74, 1
        %s380 = sand.u32 %s74, 1
        %s381 = smul.addr %s380, 64
        %s382 = scalar_lea.vmem [#allocation4], %s381
        %p383 = pneg %p87
        %p384 = pneg %p84
        %p385 = scmp.lt.s32.totalorder %s23, 1
        %s386 = scalar_select %p385, %s23, 1
        %s387 = scalar_lea.vmem %s2, %s386
        %p388 = pneg %p113
        %p389 = pneg %p110
        %p390 = pneg %p141
        %p391 = pneg %p138
        %s392 = sand.u32 %s128, 1
        %s393 = scalar_lea.sflag [#allocation6], %s392
        %s394 = sand.u32 %s128, 1
        %s395 = smul.addr %s394, 24
        %s396 = scalar_lea.vmem [#allocation5], %s395
        %s397 = smul.u32 6, %s22
        %s398 = smul.u32 16, %s24
        %p399 = scmp.lt.s32.totalorder %s23, 1
        %s400 = scalar_select %p399, %s23, 1
        %s401 = scalar_lea.vmem %s2, %s400
        %s402 = smul.u32 6, %s22
        %p403 = scmp.eq.s32.totalorder %s24, 0
        // Predicated region
        $region115: #{autocast_linear.1} parent=105 // pred_check
          %p404 = pneg %p403
        $region116: #{autocast_linear.1} parent=105 // pred_check_branch
          %406 = sbr.rel (%p404) target = $region118
        $region117: #{autocast_linear.1} parent=105 // pred_region
          %407 = vst [vmem:[#allocation2] sm:$0xff] 0.0
          %408 = vst [vmem:[#allocation2 + $0x8] sm:$0xff] 0.0
          %409 = vst [vmem:[#allocation2 + $0x10] sm:$0xff] 0.0
          %410 = vst [vmem:[#allocation2 + $0x18] sm:$0xff] 0.0
          %411 = vst [vmem:[#allocation2 + $0x20] sm:$0xff] 0.0
          %412 = vst [vmem:[#allocation2 + $0x28] sm:$0xff] 0.0
        $region118: #{autocast_linear.1} parent=105 // pred_fallthru
          _
        %v413 = vld [vmem:[#allocation2] sm:$0xff]
        %v414 = vld [vmem:[#allocation2 + $0x8] sm:$0xff]
        %v415 = vld [vmem:[#allocation2 + $0x10] sm:$0xff]
        %v416 = vld [vmem:[#allocation2 + $0x18] sm:$0xff]
        %v417 = vld [vmem:[#allocation2 + $0x20] sm:$0xff]
        %v418 = vld [vmem:[#allocation2 + $0x28] sm:$0xff]
        %v419 = vld [vmem:[%s362] sm:$0xf]
        %v420 = vld [vmem:[%s362 + $0x4] sm:$0xf]
        %v421 = vld [vmem:[%s362 + $0x8] sm:$0xf]
        %v422 = vld [vmem:[%s362 + $0xc] sm:$0xf]
        %v423 = vld [vmem:[%s362 + $0x10] sm:$0xf]
        %v424 = vld [vmem:[%s362 + $0x14] sm:$0xf]
        %v425 = vld [vmem:[%s369] sm:$0xf]
        %v426 = vld [vmem:[%s369 + $0x4] sm:$0xf]
        %v427 = vld [vmem:[%s369 + $0x8] sm:$0xf]
        %v428 = vld [vmem:[%s369 + $0xc] sm:$0xf]
        %v429 = vld [vmem:[%s369 + $0x10] sm:$0xf]
        %v430 = vld [vmem:[%s369 + $0x14] sm:$0xf]
        %v431 = vld [vmem:[%s369 + $0x18] sm:$0xf]
        %v432 = vld [vmem:[%s369 + $0x1c] sm:$0xf]
        %v433 = vld [vmem:[%s369 + $0x20] sm:$0xf]
        %v434 = vld [vmem:[%s369 + $0x24] sm:$0xf]
        %v435 = vld [vmem:[%s369 + $0x28] sm:$0xf]
        %v436 = vld [vmem:[%s369 + $0x2c] sm:$0xf]
        %v437 = vld [vmem:[%s369 + $0x30] sm:$0xf]
        %v438 = vld [vmem:[%s369 + $0x34] sm:$0xf]
        %v439 = vld [vmem:[%s369 + $0x38] sm:$0xf]
        %v440 = vld [vmem:[%s369 + $0x3c] sm:$0xf]
        %v447 = vunpack.c.l.b16 %v419
        %v448 = vunpack.c.l.b16 %v420
        %v449 = vunpack.c.l.b16 %v421
        %v450 = vunpack.c.l.b16 %v422
        %v451 = vunpack.c.l.b16 %v423
        %v452 = vunpack.c.l.b16 %v424
        %v453 = vpack.c.b16 %v448, %v447
        %v454 = vpack.c.b16 %v450, %v449
        %v455 = vpack.c.b16 %v452, %v451
        %v475 = vunpack.c.l.b16 %v425
        %v476 = vunpack.c.l.b16 %v426
        %v477 = vunpack.c.l.b16 %v427
        %v478 = vunpack.c.l.b16 %v428
        %v479 = vunpack.c.l.b16 %v429
        %v480 = vunpack.c.l.b16 %v430
        %v481 = vunpack.c.l.b16 %v431
        %v482 = vunpack.c.l.b16 %v432
        %v483 = vunpack.c.l.b16 %v433
        %v484 = vunpack.c.l.b16 %v434
        %v485 = vunpack.c.l.b16 %v435
        %v486 = vunpack.c.l.b16 %v436
        %v487 = vunpack.c.l.b16 %v437
        %v488 = vunpack.c.l.b16 %v438
        %v489 = vunpack.c.l.b16 %v439
        %v490 = vunpack.c.l.b16 %v440
        %v491 = vpack.c.b16 %v476, %v475
        %v492 = vpack.c.b16 %v478, %v477
        %v493 = vpack.c.b16 %v480, %v479
        %v494 = vpack.c.b16 %v482, %v481
        %v495 = vpack.c.b16 %v484, %v483
        %v496 = vpack.c.b16 %v486, %v485
        %v497 = vpack.c.b16 %v488, %v487
        %v498 = vpack.c.b16 %v490, %v489
        %507 = vmatpush.bf16.msra.mxu0 %v498
        %508 = vmatpush.bf16.msra.mxu0 %v497
        %509 = vmatpush.bf16.msra.mxu0 %v496
        %510 = vmatpush.bf16.msra.mxu0 %v495
        %511 = vmatpush.bf16.msra.mxu0 %v494
        %512 = vmatpush.bf16.msra.mxu0 %v493
        %513 = vmatpush.bf16.msra.mxu0 %v492
        %514 = vmatpush.bf16.msra.mxu0 %v491
        %515 = vmatmul.bf16.gmra.mxu0 %v453
        %v516 = vpop.f32.mrf.mxu0
        %v517 = vadd.f32 0.0, %v516
        %v518 = vpop.f32.mrf.mxu0
        %v519 = vadd.f32 0.0, %v518
        %520 = vmatmul.bf16.gmra.mxu0 %v454
        %v521 = vpop.f32.mrf.mxu0
        %v522 = vadd.f32 0.0, %v521
        %v523 = vpop.f32.mrf.mxu0
        %v524 = vadd.f32 0.0, %v523
        %525 = vmatmul.bf16.gmra.mxu0 %v455
        %v526 = vpop.f32.mrf.mxu0
        %v527 = vadd.f32 0.0, %v526
        %v528 = vpop.f32.mrf.mxu0
        %v529 = vadd.f32 0.0, %v528
        %530 = vdwg.mxu0
        %v531 = vadd.f32 %v413, %v517
        %v532 = vadd.f32 %v414, %v519
        %v533 = vadd.f32 %v415, %v522
        %v534 = vadd.f32 %v416, %v524
        %v535 = vadd.f32 %v417, %v527
        %v536 = vadd.f32 %v418, %v529
        %537 = vst [vmem:[#allocation2] sm:$0xff] %v531
        %538 = vst [vmem:[#allocation2 + $0x8] sm:$0xff] %v532
        %539 = vst [vmem:[#allocation2 + $0x10] sm:$0xff] %v533
        %540 = vst [vmem:[#allocation2 + $0x18] sm:$0xff] %v534
        %541 = vst [vmem:[#allocation2 + $0x20] sm:$0xff] %v535
        %542 = vst [vmem:[#allocation2 + $0x28] sm:$0xff] %v536
        %p543 = scmp.eq.s32.totalorder %s24, 2
        // Predicated region
        $region119: #{autocast_linear.1} parent=105 // pred_check
          %p544 = pneg %p543
        $region120: #{autocast_linear.1} parent=105 // pred_check_branch
          %546 = sbr.rel (%p544) target = $region122
        $region121: #{autocast_linear.1} parent=105 // pred_region
          %v547 = vld [vmem:[#allocation2] sm:$0xff]
          %v548 = vld [vmem:[#allocation2 + $0x8] sm:$0xff]
          %v549 = vld [vmem:[#allocation2 + $0x10] sm:$0xff]
          %v550 = vld [vmem:[#allocation2 + $0x18] sm:$0xff]
          %v551 = vld [vmem:[#allocation2 + $0x20] sm:$0xff]
          %v552 = vld [vmem:[#allocation2 + $0x28] sm:$0xff]
          %v553 = vld [vmem:[%s401] sm:$0x1]
          %v555 = vperm.slane %v553, 0
          %v557 = vadd.f32 %v547, %v555
          %v558 = vadd.f32 %v548, %v555
          %v559 = vadd.f32 %v549, %v555
          %v560 = vadd.f32 %v550, %v555
          %v561 = vadd.f32 %v551, %v555
          %v562 = vadd.f32 %v552, %v555
          %v563 = vpack.c.bf16 %v557, %v557
          %v564 = vpack.c.bf16 %v558, %v558
          %v565 = vpack.c.bf16 %v559, %v559
          %v566 = vpack.c.bf16 %v560, %v560
          %v567 = vpack.c.bf16 %v561, %v561
          %v568 = vpack.c.bf16 %v562, %v562
          %569 = vst [vmem:[%s396] sm:$0xf] %v563
          %570 = vst [vmem:[%s396 + $0x4] sm:$0xf] %v564
          %571 = vst [vmem:[%s396 + $0x8] sm:$0xf] %v565
          %572 = vst [vmem:[%s396 + $0xc] sm:$0xf] %v566
          %573 = vst [vmem:[%s396 + $0x10] sm:$0xf] %v567
          %574 = vst [vmem:[%s396 + $0x14] sm:$0xf] %v568
        $region122: #{autocast_linear.1} parent=105 // pred_fallthru
          _
        %s575 = sand.u32 %s128, 1
        %s576 = scalar_lea.sflag [#allocation6], %s575
        %s577 = sand.u32 %s128, 1
        %s578 = smul.addr %s577, 24
        %s579 = scalar_lea.vmem [#allocation5], %s578
        // Predicated region
        $region123: #{autocast_linear.1} parent=105 // pred_check
          %p580 = pneg %p138
        $region124: #{autocast_linear.1} parent=105 // pred_check_branch
          %582 = sbr.rel (%p580) target = $region126
        $region125: #{autocast_linear.1} parent=105 // pred_region
          %s583 = smul.u32 6, %s22
          %585 = vsyncadd %s576, 0
          %s586 = smul.addr %s583, 2
          %s587 = sadd.s32 %s23, %s586
          %s588 = smul.addr %s587, 4
          %s589 = scalar_lea.hbm %s3, %s588
          %s590 = sshll.u32 %s579, 4
          %s591 = int_to_ptr.vmem [resolvable:$true] %s590
          %s592 = sshll.u32 %s589, 4
          %s593 = int_to_ptr.hbm [resolvable:$true] %s592
          %598 = dma.vmem_to_hbm [thread:$0]  %s591, 384, %s593, %s576, 64, 128, 4
        $region126: #{autocast_linear.1} parent=105 // pred_fallthru
          _
      $region106: #{autocast_linear.1} parent=5 // pred_fallthru
        _
      %p599 = scmp.le.s32.totalorder 2, %s12
      // Predicated region
      $region127: #{autocast_linear.1} parent=5 // pred_check
        %p600 = pneg %p599
      $region128: #{autocast_linear.1} parent=5 // pred_check_branch
        %602 = sbr.rel (%p600) target = $region130
      $region129: #{autocast_linear.1} parent=5 // pred_region
        %s603 = ssub.s32 %s12, 2
        // Predicated region
        $region131: #{autocast_linear.1} parent=129 // pred_check
          %p604 = pneg %p144
        $region132: #{autocast_linear.1} parent=129 // pred_check_branch
          %606 = sbr.rel (%p604) target = $region134
        $region133: #{autocast_linear.1} parent=129 // pred_region
          %s607 = sand.u32 %s129, 1
          %s608 = scalar_lea.sflag [#allocation6], %s607
          %s609 = sand.u32 %s129, 1
          %s610 = smul.addr %s609, 24
          %s611 = scalar_lea.vmem [#allocation5], %s610
          %613 = dma.done %s608, 384
        $region134: #{autocast_linear.1} parent=129 // pred_fallthru
          _
      $region130: #{autocast_linear.1} parent=5 // pred_fallthru
        _
    $region6: #{autocast_linear.1} parent=1 // loop_footer
      %s16 = sadd.s32 1, %s12
    $region7: #{autocast_linear.1} parent=1 // loop_footer_branch
      %11 = sbr.rel target = $region3
    $region8: #{autocast_linear.1} parent=1 // loop_exit
      _
    %614 = vsyncpa [#allocation6], 1
    %s615 = scalar_lea.sflag [#allocation6], 1
    %616 = vsyncpa %s615, 1

</llo_original>
